<compile_context>
chip_gen: v6e
topology: v6e:2x2x1
jax: 0.10.0
libtpu: 0.0.40
codegen_flags: <defaults>
</compile_context>

<pallas_src>
import functools

import jax
import jax.numpy as jnp
from jax.experimental import pallas as pl
from jax.experimental.pallas import tpu as pltpu


def _fwa_kernel(x_ref, ww_ref, bw_ref, wv_ref, bv_ref, o_ref, *, n_ch, n_feat):
    """One batch tile.

    x_ref:  [tb, C*F]   flattened (channel, feature) per batch row
    ww_ref: [F, F]      weight_projection.weight (PyTorch [out, in] layout)
    bw_ref: [1, F]      weight_projection.bias
    wv_ref: [F, F]      value_projection.weight  (PyTorch [out, in] layout)
    bv_ref: [1, F]      value_projection.bias
    o_ref:  [tb, F]     aggregated output
    """
    # Contract x's last axis with the weight's `in` (last) axis -> x @ W^T,
    # without ever materializing a transposed weight.
    dn = (((1,), (1,)), ((), ()))

    ww = ww_ref[...]
    wv = wv_ref[...]
    bw = bw_ref[...]
    bv = bv_ref[...]

    # Statically unrolled over sensor channels (C is small).  Everything stays a
    # plain [tb, F] tile -> MXU matmuls + VPU elementwise only.
    t_list = []  # tanh(weight_projection(x_c))
    v_list = []  # relu(value_projection(x_c))
    for c in range(n_ch):
        xc = x_ref[:, pl.ds(c * n_feat, n_feat)]                       # [tb, F]
        tw = jax.lax.dot_general(xc, ww, dn,
                                 preferred_element_type=jnp.float32) + bw
        t_list.append(jnp.tanh(tw))
        tv = jax.lax.dot_general(xc, wv, dn,
                                 preferred_element_type=jnp.float32) + bv
        v_list.append(jnp.maximum(tv, 0.0))

    # Softmax over the channel axis (dim=1 of the original [B, C, F] input),
    # fused with the weighted sum: out = sum_c v_c * e_c / sum_c e_c.
    m = t_list[0]
    for c in range(1, n_ch):
        m = jnp.maximum(m, t_list[c])
    e0 = jnp.exp(t_list[0] - m)
    denom = e0
    numer = e0 * v_list[0]
    for c in range(1, n_ch):
        ec = jnp.exp(t_list[c] - m)
        denom = denom + ec
        numer = numer + ec * v_list[c]

    o_ref[...] = (numer / denom).astype(o_ref.dtype)


def filter_weighted_aggregation(x, w_weight, w_bias, v_weight, v_bias,
                                *, block_b=None):
    """FilterWeighted_Aggregation forward.

    x:        [B, C, F] float32   (C = sensor_channel, F = n_channels)
    w_weight: [F, F]  weight_projection.weight (PyTorch layout)
    w_bias:   [F]     weight_projection.bias
    v_weight: [F, F]  value_projection.weight  (PyTorch layout)
    v_bias:   [F]     value_projection.bias
    returns   [B, F] float32
    """
    B, C, F = x.shape
    assert w_weight.shape == (F, F) and v_weight.shape == (F, F)
    assert w_bias.shape == (F,) and v_bias.shape == (F,)

    # Batch tile: multiple of 8 (sublane granularity) when it divides B,
    # otherwise fall back to a full-extent block (always layout-legal).
    if block_b is None:
        if B % 8 == 0:
            block_b = min(B, 256)
            while B % block_b:
                block_b //= 2
        else:
            # TODO(synk): pad B to a multiple of 8 for very large ragged batches.
            block_b = B
    grid = (B // block_b,)

    # Contiguous row-major reshape -> no data movement; kernel lane-slices channels.
    x2 = x.reshape(B, C * F)
    bw2 = w_bias.reshape(1, F)
    bv2 = v_bias.reshape(1, F)

    kernel = functools.partial(_fwa_kernel, n_ch=C, n_feat=F)

    bytes_per = jnp.dtype(x.dtype).itemsize
    cost = pl.CostEstimate(
        flops=2 * 2 * B * C * F * F,                 # two linear projections
        transcendentals=2 * B * C * F,               # tanh + exp
        bytes_accessed=(B * C * F + 2 * F * F + 2 * F + B * F) * bytes_per,
    )

    return pl.pallas_call(
        kernel,
        out_shape=jax.ShapeDtypeStruct((B, F), x.dtype),
        grid_spec=pltpu.PrefetchScalarGridSpec(
            num_scalar_prefetch=0,
            grid=grid,
            in_specs=[
                pl.BlockSpec((block_b, C * F), lambda i: (i, 0)),   # x tile
                pl.BlockSpec((F, F), lambda i: (0, 0)),             # Ww (resident)
                pl.BlockSpec((1, F), lambda i: (0, 0)),             # bw (resident)
                pl.BlockSpec((F, F), lambda i: (0, 0)),             # Wv (resident)
                pl.BlockSpec((1, F), lambda i: (0, 0)),             # bv (resident)
            ],
            out_specs=pl.BlockSpec((block_b, F), lambda i: (i, 0)),
        ),
        compiler_params=pltpu.CompilerParams(
            dimension_semantics=("parallel",),       # shard batch tiles across TCs (v7x)
        ),
        cost_estimate=cost,
    )(x2, w_weight, bw2, v_weight, bv2)


def _reference(x, w_weight, w_bias, v_weight, v_bias):
    hi = jax.lax.Precision.HIGHEST
    t = jnp.tanh(jnp.einsum("bcf,gf->bcg", x, w_weight, precision=hi) + w_bias)
    w = jax.nn.softmax(t, axis=1)
    v = jax.nn.relu(jnp.einsum("bcf,gf->bcg", x, v_weight, precision=hi) + v_bias)
    return jnp.sum(v * w, axis=1)


if __name__ == "__main__":
    # Small shapes consistent with the module: batch=2, sensor_channel=4, n_channels=32.
    B, C, F = 2, 4, 32

    key = jax.random.PRNGKey(0)
    kx, kw1, kb1, kw2, kb2 = jax.random.split(key, 5)

    # nn.Linear-style init: U(-1/sqrt(fan_in), 1/sqrt(fan_in)).
    bound = 1.0 / jnp.sqrt(jnp.float32(F))
    w_weight = jax.random.uniform(kw1, (F, F), jnp.float32, -bound, bound)
    w_bias = jax.random.uniform(kb1, (F,), jnp.float32, -bound, bound)
    v_weight = jax.random.uniform(kw2, (F, F), jnp.float32, -bound, bound)
    v_bias = jax.random.uniform(kb2, (F,), jnp.float32, -bound, bound)
    x = jax.random.normal(kx, (B, C, F), jnp.float32)

    y = filter_weighted_aggregation(x, w_weight, w_bias, v_weight, v_bias)
    y = jax.block_until_ready(y)

    y_ref = _reference(x, w_weight, w_bias, v_weight, v_bias)
    assert y.shape == (B, F)
    assert jnp.allclose(y, y_ref, atol=1e-4, rtol=1e-4), (
        float(jnp.max(jnp.abs(y - y_ref))))

    print("KERNEL_OK")
</pallas_src>

<mosaic_0001>
module attributes {stable_mosaic.version = 11 : i64} {
  func.func @_fwa_kernel(%arg0: i32, %arg1: memref<2x128xf32, #tpu.memory_space<vmem>>, %arg2: memref<32x32xf32, #tpu.memory_space<vmem>>, %arg3: memref<1x32xf32, #tpu.memory_space<vmem>>, %arg4: memref<32x32xf32, #tpu.memory_space<vmem>>, %arg5: memref<1x32xf32, #tpu.memory_space<vmem>>, %arg6: memref<2x32xf32, #tpu.memory_space<vmem>>) attributes {dimension_semantics = [#tpu.dimension_semantics<parallel>], iteration_bounds = array<i64: 1>, scalar_prefetch = 0 : i64, scratch_operands = 0 : i64, tpu.core_type = #tpu.core_type<tc>, window_params = [{transform_indices = @transform_0, window_bounds = array<i64: 2, 128>}, {pipeline_mode = #tpu.pipeline_mode<synchronous>, transform_indices = @transform_1, window_bounds = array<i64: 32, 32>}, {pipeline_mode = #tpu.pipeline_mode<synchronous>, transform_indices = @transform_2, window_bounds = array<i64: 1, 32>}, {pipeline_mode = #tpu.pipeline_mode<synchronous>, transform_indices = @transform_3, window_bounds = array<i64: 32, 32>}, {pipeline_mode = #tpu.pipeline_mode<synchronous>, transform_indices = @transform_4, window_bounds = array<i64: 1, 32>}, {transform_indices = @transform_5, window_bounds = array<i64: 2, 32>}]} {
    %c0 = arith.constant 0 : index
    %c0_0 = arith.constant 0 : index
    %0 = vector.load %arg2[%c0, %c0_0] : memref<32x32xf32, #tpu.memory_space<vmem>>, vector<32x32xf32>
    %c0_1 = arith.constant 0 : index
    %c0_2 = arith.constant 0 : index
    %1 = vector.load %arg4[%c0_1, %c0_2] : memref<32x32xf32, #tpu.memory_space<vmem>>, vector<32x32xf32>
    %c0_3 = arith.constant 0 : index
    %c0_4 = arith.constant 0 : index
    %2 = vector.load %arg3[%c0_3, %c0_4] : memref<1x32xf32, #tpu.memory_space<vmem>>, vector<1x32xf32>
    %c0_5 = arith.constant 0 : index
    %c0_6 = arith.constant 0 : index
    %3 = vector.load %arg5[%c0_5, %c0_6] : memref<1x32xf32, #tpu.memory_space<vmem>>, vector<1x32xf32>
    %c0_7 = arith.constant 0 : index
    %c0_8 = arith.constant 0 : index
    %4 = vector.load %arg1[%c0_7, %c0_8] : memref<2x128xf32, #tpu.memory_space<vmem>>, vector<2x32xf32>
    %cst = arith.constant dense<0.000000e+00> : vector<2x32xf32>
    %5 = tpu.matmul %4, %0, %cst {dimension_numbers = #tpu.dot_dimension_numbers<[1], [1], [0], [0], [0, 0, 1, 0], [], []>} : vector<2x32xf32>, vector<32x32xf32>, vector<2x32xf32> -> vector<2x32xf32>
    %6 = vector.broadcast %2 : vector<1x32xf32> to vector<2x32xf32>
    %7 = arith.addf %5, %6 : vector<2x32xf32>
    %8 = math.tanh %7 : vector<2x32xf32>
    %cst_9 = arith.constant dense<0.000000e+00> : vector<2x32xf32>
    %9 = tpu.matmul %4, %1, %cst_9 {dimension_numbers = #tpu.dot_dimension_numbers<[1], [1], [0], [0], [0, 0, 1, 0], [], []>} : vector<2x32xf32>, vector<32x32xf32>, vector<2x32xf32> -> vector<2x32xf32>
    %10 = vector.broadcast %3 : vector<1x32xf32> to vector<2x32xf32>
    %11 = arith.addf %9, %10 : vector<2x32xf32>
    %cst_10 = arith.constant 0.000000e+00 : f32
    %12 = vector.broadcast %cst_10 : f32 to vector<2x32xf32>
    %13 = arith.maximumf %11, %12 : vector<2x32xf32>
    %c0_11 = arith.constant 0 : index
    %c32 = arith.constant 32 : index
    %14 = vector.load %arg1[%c0_11, %c32] : memref<2x128xf32, #tpu.memory_space<vmem>>, vector<2x32xf32>
    %cst_12 = arith.constant dense<0.000000e+00> : vector<2x32xf32>
    %15 = tpu.matmul %14, %0, %cst_12 {dimension_numbers = #tpu.dot_dimension_numbers<[1], [1], [0], [0], [0, 0, 1, 0], [], []>} : vector<2x32xf32>, vector<32x32xf32>, vector<2x32xf32> -> vector<2x32xf32>
    %16 = vector.broadcast %2 : vector<1x32xf32> to vector<2x32xf32>
    %17 = arith.addf %15, %16 : vector<2x32xf32>
    %18 = math.tanh %17 : vector<2x32xf32>
    %cst_13 = arith.constant dense<0.000000e+00> : vector<2x32xf32>
    %19 = tpu.matmul %14, %1, %cst_13 {dimension_numbers = #tpu.dot_dimension_numbers<[1], [1], [0], [0], [0, 0, 1, 0], [], []>} : vector<2x32xf32>, vector<32x32xf32>, vector<2x32xf32> -> vector<2x32xf32>
    %20 = vector.broadcast %3 : vector<1x32xf32> to vector<2x32xf32>
    %21 = arith.addf %19, %20 : vector<2x32xf32>
    %cst_14 = arith.constant 0.000000e+00 : f32
    %22 = vector.broadcast %cst_14 : f32 to vector<2x32xf32>
    %23 = arith.maximumf %21, %22 : vector<2x32xf32>
    %c0_15 = arith.constant 0 : index
    %c64 = arith.constant 64 : index
    %24 = vector.load %arg1[%c0_15, %c64] : memref<2x128xf32, #tpu.memory_space<vmem>>, vector<2x32xf32>
    %cst_16 = arith.constant dense<0.000000e+00> : vector<2x32xf32>
    %25 = tpu.matmul %24, %0, %cst_16 {dimension_numbers = #tpu.dot_dimension_numbers<[1], [1], [0], [0], [0, 0, 1, 0], [], []>} : vector<2x32xf32>, vector<32x32xf32>, vector<2x32xf32> -> vector<2x32xf32>
    %26 = vector.broadcast %2 : vector<1x32xf32> to vector<2x32xf32>
    %27 = arith.addf %25, %26 : vector<2x32xf32>
    %28 = math.tanh %27 : vector<2x32xf32>
    %cst_17 = arith.constant dense<0.000000e+00> : vector<2x32xf32>
    %29 = tpu.matmul %24, %1, %cst_17 {dimension_numbers = #tpu.dot_dimension_numbers<[1], [1], [0], [0], [0, 0, 1, 0], [], []>} : vector<2x32xf32>, vector<32x32xf32>, vector<2x32xf32> -> vector<2x32xf32>
    %30 = vector.broadcast %3 : vector<1x32xf32> to vector<2x32xf32>
    %31 = arith.addf %29, %30 : vector<2x32xf32>
    %cst_18 = arith.constant 0.000000e+00 : f32
    %32 = vector.broadcast %cst_18 : f32 to vector<2x32xf32>
    %33 = arith.maximumf %31, %32 : vector<2x32xf32>
    %c0_19 = arith.constant 0 : index
    %c96 = arith.constant 96 : index
    %34 = vector.load %arg1[%c0_19, %c96] : memref<2x128xf32, #tpu.memory_space<vmem>>, vector<2x32xf32>
    %cst_20 = arith.constant dense<0.000000e+00> : vector<2x32xf32>
    %35 = tpu.matmul %34, %0, %cst_20 {dimension_numbers = #tpu.dot_dimension_numbers<[1], [1], [0], [0], [0, 0, 1, 0], [], []>} : vector<2x32xf32>, vector<32x32xf32>, vector<2x32xf32> -> vector<2x32xf32>
    %36 = vector.broadcast %2 : vector<1x32xf32> to vector<2x32xf32>
    %37 = arith.addf %35, %36 : vector<2x32xf32>
    %38 = math.tanh %37 : vector<2x32xf32>
    %cst_21 = arith.constant dense<0.000000e+00> : vector<2x32xf32>
    %39 = tpu.matmul %34, %1, %cst_21 {dimension_numbers = #tpu.dot_dimension_numbers<[1], [1], [0], [0], [0, 0, 1, 0], [], []>} : vector<2x32xf32>, vector<32x32xf32>, vector<2x32xf32> -> vector<2x32xf32>
    %40 = vector.broadcast %3 : vector<1x32xf32> to vector<2x32xf32>
    %41 = arith.addf %39, %40 : vector<2x32xf32>
    %cst_22 = arith.constant 0.000000e+00 : f32
    %42 = vector.broadcast %cst_22 : f32 to vector<2x32xf32>
    %43 = arith.maximumf %41, %42 : vector<2x32xf32>
    %44 = arith.maximumf %8, %18 : vector<2x32xf32>
    %45 = arith.maximumf %44, %28 : vector<2x32xf32>
    %46 = arith.maximumf %45, %38 : vector<2x32xf32>
    %47 = arith.subf %8, %46 : vector<2x32xf32>
    %48 = math.exp %47 : vector<2x32xf32>
    %49 = arith.mulf %48, %13 : vector<2x32xf32>
    %50 = arith.subf %18, %46 : vector<2x32xf32>
    %51 = math.exp %50 : vector<2x32xf32>
    %52 = arith.addf %48, %51 : vector<2x32xf32>
    %53 = arith.mulf %51, %23 : vector<2x32xf32>
    %54 = arith.addf %49, %53 : vector<2x32xf32>
    %55 = arith.subf %28, %46 : vector<2x32xf32>
    %56 = math.exp %55 : vector<2x32xf32>
    %57 = arith.addf %52, %56 : vector<2x32xf32>
    %58 = arith.mulf %56, %33 : vector<2x32xf32>
    %59 = arith.addf %54, %58 : vector<2x32xf32>
    %60 = arith.subf %38, %46 : vector<2x32xf32>
    %61 = math.exp %60 : vector<2x32xf32>
    %62 = arith.addf %57, %61 : vector<2x32xf32>
    %63 = arith.mulf %61, %43 : vector<2x32xf32>
    %64 = arith.addf %59, %63 : vector<2x32xf32>
    %65 = arith.divf %64, %62 : vector<2x32xf32>
    %c0_23 = arith.constant 0 : index
    %c0_24 = arith.constant 0 : index
    %66 = vector.load %arg6[%c0_23, %c0_24] : memref<2x32xf32, #tpu.memory_space<vmem>>, vector<2x32xf32>
    tpu.vector_store %arg6[%c0_23, %c0_24], %65 {strides = array<i32>} : memref<2x32xf32, #tpu.memory_space<vmem>>, vector<2x32xf32>,
    return
  }
  func.func @transform_0(%arg0: i32) -> (i32, i32) {
    %c0_i32 = arith.constant 0 : i32
    %c0_i32_0 = arith.constant 0 : i32
    return %arg0, %c0_i32 : i32, i32
  }
  func.func @transform_1(%arg0: i32) -> (i32, i32) {
    %c0_i32 = arith.constant 0 : i32
    %c0_i32_0 = arith.constant 0 : i32
    %c0_i32_1 = arith.constant 0 : i32
    return %c0_i32, %c0_i32_0 : i32, i32
  }
  func.func @transform_2(%arg0: i32) -> (i32, i32) {
    %c0_i32 = arith.constant 0 : i32
    %c0_i32_0 = arith.constant 0 : i32
    %c0_i32_1 = arith.constant 0 : i32
    return %c0_i32, %c0_i32_0 : i32, i32
  }
  func.func @transform_3(%arg0: i32) -> (i32, i32) {
    %c0_i32 = arith.constant 0 : i32
    %c0_i32_0 = arith.constant 0 : i32
    %c0_i32_1 = arith.constant 0 : i32
    return %c0_i32, %c0_i32_0 : i32, i32
  }
  func.func @transform_4(%arg0: i32) -> (i32, i32) {
    %c0_i32 = arith.constant 0 : i32
    %c0_i32_0 = arith.constant 0 : i32
    %c0_i32_1 = arith.constant 0 : i32
    return %c0_i32, %c0_i32_0 : i32, i32
  }
  func.func @transform_5(%arg0: i32) -> (i32, i32) {
    %c0_i32 = arith.constant 0 : i32
    %c0_i32_0 = arith.constant 0 : i32
    return %arg0, %c0_i32 : i32, i32
  }
}

</mosaic_0001>

<llo_original>
// kernel: tpu_custom_call.1
$region0: #{tpu_custom_call.1}
  #allocation0 [shape = 'u32[]', space=smem, size = 0x4, offset = 0x4, fixed_abs, tag = 'smem constant byte address 0x4 - core index']
  #allocation1 [shape = 'u32[144,128]{1,0:T(1,128)}', space=vmem, size = 0x12000, scoped, tag = 'internal scratch']
  %s0 = inlined_call_operand.hbm [shape: f32[2,128], index: 0, kind: input, shape index: {}]
  %s1 = inlined_call_operand.hbm [shape: f32[32,32], index: 1, kind: input, shape index: {}]
  %s2 = inlined_call_operand.vmem [shape: f32[1,32], index: 2, kind: input, shape index: {}]
  %s3 = inlined_call_operand.hbm [shape: f32[32,32], index: 3, kind: input, shape index: {}]
  %s4 = inlined_call_operand.vmem [shape: f32[1,32], index: 4, kind: input, shape index: {}]
  %s5 = inlined_call_operand.hbm [shape: f32[2,32], index: 5, kind: output, shape index: {}]
  %s6 = sld [smem:[#allocation0]]
  $region42: #{tpu_custom_call.1} parent=0
    _
  %s8 = ssub.s32 1, %s6
  %s9 = scalar_select 0, %s8, %s6
  $region1: #{tpu_custom_call.1} parent=0
    #allocation2 [shape = 'u8[1024]{0}', space=vmem, size = 0x400, scoped, tag = 'input window, operand 0, single buffered']
    #allocation3 [shape = 's32[1]{0}', space=sflag, size = 0x4, scoped, tag = 'scoped memory for tpu_custom_call.1']
    #allocation4 [shape = 's32[1]{0}', space=sflag, size = 0x4, scoped, tag = 'scoped memory for tpu_custom_call.1']
    #allocation5 [shape = 'u8[16384]{0}', space=vmem, size = 0x4000, scoped, tag = 'input window, operand 1, single buffered']
    #allocation6 [shape = 's32[1]{0}', space=sflag, size = 0x4, scoped, tag = 'scoped memory for tpu_custom_call.1']
    #allocation7 [shape = 'u8[16384]{0}', space=vmem, size = 0x4000, scoped, tag = 'input window, operand 3, single buffered']
    #allocation8 [shape = 'u8[1024]{0}', space=vmem, size = 0x400, scoped, tag = 'output window, operand 0, single buffered']
    %10 = vsyncpa [#allocation3], 0
    %11 = vsyncpa [#allocation6], 0
    %12 = vsyncpa [#allocation4], 0
    // Predicated region
    $region2: #{tpu_custom_call.1} parent=1 // pred_check
      _
    $region3: #{tpu_custom_call.1} parent=1 // pred_check_branch
      %14 = sbr.rel (0) target = $region5
    $region4: #{tpu_custom_call.1} parent=1 // pred_region
      %s16 = ssub.s32 32, 32
      %17 = vsyncadd [#allocation3], %s16
      %s19 = sshll.u32 [#allocation2], 4
      %s20 = int_to_ptr.vmem [resolvable:$true] %s19
      %22 = dma.hbm_to_vmem [thread:$0]  %s0, 32, %s20, [#allocation3]
    $region5: #{tpu_custom_call.1} parent=1 // pred_fallthru
      _
    // Predicated region
    $region6: #{tpu_custom_call.1} parent=1 // pred_check
      _
    $region7: #{tpu_custom_call.1} parent=1 // pred_check_branch
      %24 = sbr.rel (0) target = $region9
    $region8: #{tpu_custom_call.1} parent=1 // pred_region
      %s26 = ssub.s32 512, 512
      %27 = vsyncadd [#allocation6], %s26
      %s28 = sshll.u32 [#allocation5], 4
      %s29 = int_to_ptr.vmem [resolvable:$true] %s28
      %34 = dma.hbm_to_vmem [thread:$0]  %s1, 512, %s29, [#allocation6], 128, 128, 8
    $region9: #{tpu_custom_call.1} parent=1 // pred_fallthru
      _
    // Predicated region
    $region10: #{tpu_custom_call.1} parent=1 // pred_check
      _
    $region11: #{tpu_custom_call.1} parent=1 // pred_check_branch
      %36 = sbr.rel (0) target = $region13
    $region12: #{tpu_custom_call.1} parent=1 // pred_region
      _
    $region13: #{tpu_custom_call.1} parent=1 // pred_fallthru
      _
    // Predicated region
    $region14: #{tpu_custom_call.1} parent=1 // pred_check
      _
    $region15: #{tpu_custom_call.1} parent=1 // pred_check_branch
      %38 = sbr.rel (0) target = $region17
    $region16: #{tpu_custom_call.1} parent=1 // pred_region
      %s40 = ssub.s32 512, 512
      %41 = vsyncadd [#allocation6], %s40
      %s42 = sshll.u32 [#allocation7], 4
      %s43 = int_to_ptr.vmem [resolvable:$true] %s42
      %48 = dma.hbm_to_vmem [thread:$0]  %s3, 512, %s43, [#allocation6], 128, 128, 8
    $region17: #{tpu_custom_call.1} parent=1 // pred_fallthru
      _
    // Predicated region
    $region18: #{tpu_custom_call.1} parent=1 // pred_check
      _
    $region19: #{tpu_custom_call.1} parent=1 // pred_check_branch
      %50 = sbr.rel (0) target = $region21
    $region20: #{tpu_custom_call.1} parent=1 // pred_region
      _
    $region21: #{tpu_custom_call.1} parent=1 // pred_fallthru
      _
    // Predicated region
    $region22: #{tpu_custom_call.1} parent=1 // pred_check
      _
    $region23: #{tpu_custom_call.1} parent=1 // pred_check_branch
      %52 = sbr.rel (0) target = $region25
    $region24: #{tpu_custom_call.1} parent=1 // pred_region
      %53 = dma.done [#allocation3], 32
    $region25: #{tpu_custom_call.1} parent=1 // pred_fallthru
      _
    // Predicated region
    $region26: #{tpu_custom_call.1} parent=1 // pred_check
      _
    $region27: #{tpu_custom_call.1} parent=1 // pred_check_branch
      %55 = sbr.rel (0) target = $region29
    $region28: #{tpu_custom_call.1} parent=1 // pred_region
      %56 = dma.done [#allocation6], 512
    $region29: #{tpu_custom_call.1} parent=1 // pred_fallthru
      _
    // Predicated region
    $region30: #{tpu_custom_call.1} parent=1 // pred_check
      _
    $region31: #{tpu_custom_call.1} parent=1 // pred_check_branch
      %58 = sbr.rel (0) target = $region33
    $region32: #{tpu_custom_call.1} parent=1 // pred_region
      %59 = dma.done [#allocation6], 512
    $region33: #{tpu_custom_call.1} parent=1 // pred_fallthru
      _
    %v60 = vld [vmem:[#allocation5] sm:$0xff]
    %v61 = vld [vmem:[#allocation5 + $0x8] sm:$0xff]
    %v62 = vld [vmem:[#allocation5 + $0x10] sm:$0xff]
    %v63 = vld [vmem:[#allocation5 + $0x18] sm:$0xff]
    %v64 = vld [vmem:[#allocation7] sm:$0xff]
    %v65 = vld [vmem:[#allocation7 + $0x8] sm:$0xff]
    %v66 = vld [vmem:[#allocation7 + $0x10] sm:$0xff]
    %v67 = vld [vmem:[#allocation7 + $0x18] sm:$0xff]
    %v68 = vld [vmem:[%s2] sm:$0x1]
    %v69 = vld [vmem:[%s4] sm:$0x1]
    %v70 = vld [vmem:[#allocation2] sm:$0x3]
    %v72 = vlaneseq
    %v73 = vshrl.u32 %v72, 7
    %v74 = vsub.s32 0, %v73
    %v75 = vrot.slane %v68, %v74
    %vm77 = vcmask 261120
    %v79 = vsel %vm77, %v70, 0
    %v82 = vsel %vm77, %v60, 0
    %v85 = vsel %vm77, %v61, 0
    %v88 = vsel %vm77, %v62, 0
    %v91 = vsel %vm77, %v63, 0
    %93 = vmatprep.subr.mxu0 0.0
    %94 = vmatpush1.xpose.msra.mxu0 0.0
    %95 = vmatprep.subr.mxu0 0.0
    %96 = vmatpush1.xpose.msra.mxu0 0.0
    %97 = vmatprep.subr.mxu0 0.0
    %98 = vmatpush1.xpose.msra.mxu0 0.0
    %99 = vmatprep.subr.mxu0 0.0
    %100 = vmatpush1.xpose.msra.mxu0 0.0
    %101 = vmatprep.subr.mxu0 0.0
    %102 = vmatpush1.xpose.msra.mxu0 0.0
    %103 = vmatprep.subr.mxu0 0.0
    %104 = vmatpush1.xpose.msra.mxu0 0.0
    %105 = vmatprep.subr.mxu0 0.0
    %106 = vmatpush1.xpose.msra.mxu0 0.0
    %107 = vmatprep.subr.mxu0 0.0
    %108 = vmatpush1.xpose.msra.mxu0 0.0
    %109 = vmatprep.subr.mxu0 0.0
    %110 = vmatpush1.xpose.msra.mxu0 0.0
    %111 = vmatprep.subr.mxu0 0.0
    %112 = vmatpush1.xpose.msra.mxu0 0.0
    %113 = vmatprep.subr.mxu0 0.0
    %114 = vmatpush1.xpose.msra.mxu0 0.0
    %115 = vmatprep.subr.mxu0 0.0
    %116 = vmatpush1.xpose.msra.mxu0 0.0
    %117 = vmatprep.subr.mxu0 0.0
    %118 = vmatpush1.xpose.msra.mxu0 %v91
    %119 = vmatprep.subr.mxu0 0.0
    %120 = vmatpush1.xpose.msra.mxu0 %v88
    %121 = vmatprep.subr.mxu0 0.0
    %122 = vmatpush1.xpose.msra.mxu0 %v85
    %123 = vmatprep.subr.mxu0 0.0
    %124 = vmatpush1.xpose.msra.mxu0 %v82
    %125 = vmatprep.subr.mxu0 0.0
    %126 = vmatpush2.xpose.msra.mxu0 0.0
    %127 = vmatprep.subr.mxu0 0.0
    %128 = vmatpush2.xpose.msra.mxu0 0.0
    %129 = vmatprep.subr.mxu0 0.0
    %130 = vmatpush2.xpose.msra.mxu0 0.0
    %131 = vmatprep.subr.mxu0 0.0
    %132 = vmatpush2.xpose.msra.mxu0 0.0
    %133 = vmatprep.subr.mxu0 0.0
    %134 = vmatpush2.xpose.msra.mxu0 0.0
    %135 = vmatprep.subr.mxu0 0.0
    %136 = vmatpush2.xpose.msra.mxu0 0.0
    %137 = vmatprep.subr.mxu0 0.0
    %138 = vmatpush2.xpose.msra.mxu0 0.0
    %139 = vmatprep.subr.mxu0 0.0
    %140 = vmatpush2.xpose.msra.mxu0 0.0
    %141 = vmatprep.subr.mxu0 0.0
    %142 = vmatpush2.xpose.msra.mxu0 0.0
    %143 = vmatprep.subr.mxu0 0.0
    %144 = vmatpush2.xpose.msra.mxu0 0.0
    %145 = vmatprep.subr.mxu0 0.0
    %146 = vmatpush2.xpose.msra.mxu0 0.0
    %147 = vmatprep.subr.mxu0 0.0
    %148 = vmatpush2.xpose.msra.mxu0 0.0
    %149 = vmatprep.subr.mxu0 0.0
    %150 = vmatpush2.xpose.msra.mxu0 0.0
    %151 = vmatprep.subr.mxu0 0.0
    %152 = vmatpush2.xpose.msra.mxu0 0.0
    %153 = vmatprep.subr.mxu0 0.0
    %154 = vmatpush2.xpose.msra.mxu0 0.0
    %155 = vmatprep.subr.mxu0 0.0
    %156 = vmatpush2.xpose.msra.mxu0 0.0
    %157 = vmatprep.mubr.f32.mxu0 0.0
    %158 = vmatmul.mubr.f32.gmra.mxu0 %v79
    %v159 = vpop.f32.mrf.mxu0
    %v160 = vadd.f32 %v75, %v159
    %v161 = vpop.f32.mrf.mxu0
    %162 = vdwg.mxu0
    %v163 = vtanh.pop %v160
    %v165 = vlaneseq
    %v166 = vshrl.u32 %v165, 7
    %v167 = vsub.s32 0, %v166
    %v168 = vrot.slane %v69, %v167
    %v171 = vsel %vm77, %v64, 0
    %v174 = vsel %vm77, %v65, 0
    %v177 = vsel %vm77, %v66, 0
    %v180 = vsel %vm77, %v67, 0
    %182 = vmatprep.subr.mxu0 0.0
    %183 = vmatpush1.xpose.msra.mxu0 0.0
    %184 = vmatprep.subr.mxu0 0.0
    %185 = vmatpush1.xpose.msra.mxu0 0.0
    %186 = vmatprep.subr.mxu0 0.0
    %187 = vmatpush1.xpose.msra.mxu0 0.0
    %188 = vmatprep.subr.mxu0 0.0
    %189 = vmatpush1.xpose.msra.mxu0 0.0
    %190 = vmatprep.subr.mxu0 0.0
    %191 = vmatpush1.xpose.msra.mxu0 0.0
    %192 = vmatprep.subr.mxu0 0.0
    %193 = vmatpush1.xpose.msra.mxu0 0.0
    %194 = vmatprep.subr.mxu0 0.0
    %195 = vmatpush1.xpose.msra.mxu0 0.0
    %196 = vmatprep.subr.mxu0 0.0
    %197 = vmatpush1.xpose.msra.mxu0 0.0
    %198 = vmatprep.subr.mxu0 0.0
    %199 = vmatpush1.xpose.msra.mxu0 0.0
    %200 = vmatprep.subr.mxu0 0.0
    %201 = vmatpush1.xpose.msra.mxu0 0.0
    %202 = vmatprep.subr.mxu0 0.0
    %203 = vmatpush1.xpose.msra.mxu0 0.0
    %204 = vmatprep.subr.mxu0 0.0
    %205 = vmatpush1.xpose.msra.mxu0 0.0
    %206 = vmatprep.subr.mxu0 0.0
    %207 = vmatpush1.xpose.msra.mxu0 %v180
    %208 = vmatprep.subr.mxu0 0.0
    %209 = vmatpush1.xpose.msra.mxu0 %v177
    %210 = vmatprep.subr.mxu0 0.0
    %211 = vmatpush1.xpose.msra.mxu0 %v174
    %212 = vmatprep.subr.mxu0 0.0
    %213 = vmatpush1.xpose.msra.mxu0 %v171
    %214 = vmatprep.subr.mxu0 0.0
    %215 = vmatpush2.xpose.msra.mxu0 0.0
    %216 = vmatprep.subr.mxu0 0.0
    %217 = vmatpush2.xpose.msra.mxu0 0.0
    %218 = vmatprep.subr.mxu0 0.0
    %219 = vmatpush2.xpose.msra.mxu0 0.0
    %220 = vmatprep.subr.mxu0 0.0
    %221 = vmatpush2.xpose.msra.mxu0 0.0
    %222 = vmatprep.subr.mxu0 0.0
    %223 = vmatpush2.xpose.msra.mxu0 0.0
    %224 = vmatprep.subr.mxu0 0.0
    %225 = vmatpush2.xpose.msra.mxu0 0.0
    %226 = vmatprep.subr.mxu0 0.0
    %227 = vmatpush2.xpose.msra.mxu0 0.0
    %228 = vmatprep.subr.mxu0 0.0
    %229 = vmatpush2.xpose.msra.mxu0 0.0
    %230 = vmatprep.subr.mxu0 0.0
    %231 = vmatpush2.xpose.msra.mxu0 0.0
    %232 = vmatprep.subr.mxu0 0.0
    %233 = vmatpush2.xpose.msra.mxu0 0.0
    %234 = vmatprep.subr.mxu0 0.0
    %235 = vmatpush2.xpose.msra.mxu0 0.0
    %236 = vmatprep.subr.mxu0 0.0
    %237 = vmatpush2.xpose.msra.mxu0 0.0
    %238 = vmatprep.subr.mxu0 0.0
    %239 = vmatpush2.xpose.msra.mxu0 0.0
    %240 = vmatprep.subr.mxu0 0.0
    %241 = vmatpush2.xpose.msra.mxu0 0.0
    %242 = vmatprep.subr.mxu0 0.0
    %243 = vmatpush2.xpose.msra.mxu0 0.0
    %244 = vmatprep.subr.mxu0 0.0
    %245 = vmatpush2.xpose.msra.mxu0 0.0
    %246 = vmatprep.mubr.f32.mxu0 0.0
    %247 = vmatmul.mubr.f32.gmra.mxu0 %v79
    %v248 = vpop.f32.mrf.mxu0
    %v249 = vadd.f32 %v168, %v248
    %v250 = vpop.f32.mrf.mxu0
    %251 = vdwg.mxu0
    %v252 = vmax.f32 %v249, 0.0
    %253 = vrot.lane.b32.xlu0 %v70, 96
    %v254 = vpop.permute.xlu0 %253
    %v255 = vsel %vm77, %v254, 0
    %257 = vmatprep.subr.mxu0 0.0
    %258 = vmatpush1.xpose.msra.mxu0 0.0
    %259 = vmatprep.subr.mxu0 0.0
    %260 = vmatpush1.xpose.msra.mxu0 0.0
    %261 = vmatprep.subr.mxu0 0.0
    %262 = vmatpush1.xpose.msra.mxu0 0.0
    %263 = vmatprep.subr.mxu0 0.0
    %264 = vmatpush1.xpose.msra.mxu0 0.0
    %265 = vmatprep.subr.mxu0 0.0
    %266 = vmatpush1.xpose.msra.mxu0 0.0
    %267 = vmatprep.subr.mxu0 0.0
    %268 = vmatpush1.xpose.msra.mxu0 0.0
    %269 = vmatprep.subr.mxu0 0.0
    %270 = vmatpush1.xpose.msra.mxu0 0.0
    %271 = vmatprep.subr.mxu0 0.0
    %272 = vmatpush1.xpose.msra.mxu0 0.0
    %273 = vmatprep.subr.mxu0 0.0
    %274 = vmatpush1.xpose.msra.mxu0 0.0
    %275 = vmatprep.subr.mxu0 0.0
    %276 = vmatpush1.xpose.msra.mxu0 0.0
    %277 = vmatprep.subr.mxu0 0.0
    %278 = vmatpush1.xpose.msra.mxu0 0.0
    %279 = vmatprep.subr.mxu0 0.0
    %280 = vmatpush1.xpose.msra.mxu0 0.0
    %281 = vmatprep.subr.mxu0 0.0
    %282 = vmatpush1.xpose.msra.mxu0 %v91
    %283 = vmatprep.subr.mxu0 0.0
    %284 = vmatpush1.xpose.msra.mxu0 %v88
    %285 = vmatprep.subr.mxu0 0.0
    %286 = vmatpush1.xpose.msra.mxu0 %v85
    %287 = vmatprep.subr.mxu0 0.0
    %288 = vmatpush1.xpose.msra.mxu0 %v82
    %289 = vmatprep.subr.mxu0 0.0
    %290 = vmatpush2.xpose.msra.mxu0 0.0
    %291 = vmatprep.subr.mxu0 0.0
    %292 = vmatpush2.xpose.msra.mxu0 0.0
    %293 = vmatprep.subr.mxu0 0.0
    %294 = vmatpush2.xpose.msra.mxu0 0.0
    %295 = vmatprep.subr.mxu0 0.0
    %296 = vmatpush2.xpose.msra.mxu0 0.0
    %297 = vmatprep.subr.mxu0 0.0
    %298 = vmatpush2.xpose.msra.mxu0 0.0
    %299 = vmatprep.subr.mxu0 0.0
    %300 = vmatpush2.xpose.msra.mxu0 0.0
    %301 = vmatprep.subr.mxu0 0.0
    %302 = vmatpush2.xpose.msra.mxu0 0.0
    %303 = vmatprep.subr.mxu0 0.0
    %304 = vmatpush2.xpose.msra.mxu0 0.0
    %305 = vmatprep.subr.mxu0 0.0
    %306 = vmatpush2.xpose.msra.mxu0 0.0
    %307 = vmatprep.subr.mxu0 0.0
    %308 = vmatpush2.xpose.msra.mxu0 0.0
    %309 = vmatprep.subr.mxu0 0.0
    %310 = vmatpush2.xpose.msra.mxu0 0.0
    %311 = vmatprep.subr.mxu0 0.0
    %312 = vmatpush2.xpose.msra.mxu0 0.0
    %313 = vmatprep.subr.mxu0 0.0
    %314 = vmatpush2.xpose.msra.mxu0 0.0
    %315 = vmatprep.subr.mxu0 0.0
    %316 = vmatpush2.xpose.msra.mxu0 0.0
    %317 = vmatprep.subr.mxu0 0.0
    %318 = vmatpush2.xpose.msra.mxu0 0.0
    %319 = vmatprep.subr.mxu0 0.0
    %320 = vmatpush2.xpose.msra.mxu0 0.0
    %321 = vmatprep.mubr.f32.mxu0 0.0
    %322 = vmatmul.mubr.f32.gmra.mxu0 %v255
    %v323 = vpop.f32.mrf.mxu0
    %v324 = vadd.f32 %v75, %v323
    %v325 = vpop.f32.mrf.mxu0
    %326 = vdwg.mxu0
    %v327 = vtanh.pop %v324
    %328 = vmatprep.subr.mxu0 0.0
    %329 = vmatpush1.xpose.msra.mxu0 0.0
    %330 = vmatprep.subr.mxu0 0.0
    %331 = vmatpush1.xpose.msra.mxu0 0.0
    %332 = vmatprep.subr.mxu0 0.0
    %333 = vmatpush1.xpose.msra.mxu0 0.0
    %334 = vmatprep.subr.mxu0 0.0
    %335 = vmatpush1.xpose.msra.mxu0 0.0
    %336 = vmatprep.subr.mxu0 0.0
    %337 = vmatpush1.xpose.msra.mxu0 0.0
    %338 = vmatprep.subr.mxu0 0.0
    %339 = vmatpush1.xpose.msra.mxu0 0.0
    %340 = vmatprep.subr.mxu0 0.0
    %341 = vmatpush1.xpose.msra.mxu0 0.0
    %342 = vmatprep.subr.mxu0 0.0
    %343 = vmatpush1.xpose.msra.mxu0 0.0
    %344 = vmatprep.subr.mxu0 0.0
    %345 = vmatpush1.xpose.msra.mxu0 0.0
    %346 = vmatprep.subr.mxu0 0.0
    %347 = vmatpush1.xpose.msra.mxu0 0.0
    %348 = vmatprep.subr.mxu0 0.0
    %349 = vmatpush1.xpose.msra.mxu0 0.0
    %350 = vmatprep.subr.mxu0 0.0
    %351 = vmatpush1.xpose.msra.mxu0 0.0
    %352 = vmatprep.subr.mxu0 0.0
    %353 = vmatpush1.xpose.msra.mxu0 %v180
    %354 = vmatprep.subr.mxu0 0.0
    %355 = vmatpush1.xpose.msra.mxu0 %v177
    %356 = vmatprep.subr.mxu0 0.0
    %357 = vmatpush1.xpose.msra.mxu0 %v174
    %358 = vmatprep.subr.mxu0 0.0
    %359 = vmatpush1.xpose.msra.mxu0 %v171
    %360 = vmatprep.subr.mxu0 0.0
    %361 = vmatpush2.xpose.msra.mxu0 0.0
    %362 = vmatprep.subr.mxu0 0.0
    %363 = vmatpush2.xpose.msra.mxu0 0.0
    %364 = vmatprep.subr.mxu0 0.0
    %365 = vmatpush2.xpose.msra.mxu0 0.0
    %366 = vmatprep.subr.mxu0 0.0
    %367 = vmatpush2.xpose.msra.mxu0 0.0
    %368 = vmatprep.subr.mxu0 0.0
    %369 = vmatpush2.xpose.msra.mxu0 0.0
    %370 = vmatprep.subr.mxu0 0.0
    %371 = vmatpush2.xpose.msra.mxu0 0.0
    %372 = vmatprep.subr.mxu0 0.0
    %373 = vmatpush2.xpose.msra.mxu0 0.0
    %374 = vmatprep.subr.mxu0 0.0
    %375 = vmatpush2.xpose.msra.mxu0 0.0
    %376 = vmatprep.subr.mxu0 0.0
    %377 = vmatpush2.xpose.msra.mxu0 0.0
    %378 = vmatprep.subr.mxu0 0.0
    %379 = vmatpush2.xpose.msra.mxu0 0.0
    %380 = vmatprep.subr.mxu0 0.0
    %381 = vmatpush2.xpose.msra.mxu0 0.0
    %382 = vmatprep.subr.mxu0 0.0
    %383 = vmatpush2.xpose.msra.mxu0 0.0
    %384 = vmatprep.subr.mxu0 0.0
    %385 = vmatpush2.xpose.msra.mxu0 0.0
    %386 = vmatprep.subr.mxu0 0.0
    %387 = vmatpush2.xpose.msra.mxu0 0.0
    %388 = vmatprep.subr.mxu0 0.0
    %389 = vmatpush2.xpose.msra.mxu0 0.0
    %390 = vmatprep.subr.mxu0 0.0
    %391 = vmatpush2.xpose.msra.mxu0 0.0
    %392 = vmatprep.mubr.f32.mxu0 0.0
    %393 = vmatmul.mubr.f32.gmra.mxu0 %v255
    %v394 = vpop.f32.mrf.mxu0
    %v395 = vadd.f32 %v168, %v394
    %v396 = vpop.f32.mrf.mxu0
    %397 = vdwg.mxu0
    %v398 = vmax.f32 %v395, 0.0
    %399 = vrot.lane.b32.xlu0 %v70, 64
    %v400 = vpop.permute.xlu0 %399
    %v401 = vsel %vm77, %v400, 0
    %403 = vmatprep.subr.mxu0 0.0
    %404 = vmatpush1.xpose.msra.mxu0 0.0
    %405 = vmatprep.subr.mxu0 0.0
    %406 = vmatpush1.xpose.msra.mxu0 0.0
    %407 = vmatprep.subr.mxu0 0.0
    %408 = vmatpush1.xpose.msra.mxu0 0.0
    %409 = vmatprep.subr.mxu0 0.0
    %410 = vmatpush1.xpose.msra.mxu0 0.0
    %411 = vmatprep.subr.mxu0 0.0
    %412 = vmatpush1.xpose.msra.mxu0 0.0
    %413 = vmatprep.subr.mxu0 0.0
    %414 = vmatpush1.xpose.msra.mxu0 0.0
    %415 = vmatprep.subr.mxu0 0.0
    %416 = vmatpush1.xpose.msra.mxu0 0.0
    %417 = vmatprep.subr.mxu0 0.0
    %418 = vmatpush1.xpose.msra.mxu0 0.0
    %419 = vmatprep.subr.mxu0 0.0
    %420 = vmatpush1.xpose.msra.mxu0 0.0
    %421 = vmatprep.subr.mxu0 0.0
    %422 = vmatpush1.xpose.msra.mxu0 0.0
    %423 = vmatprep.subr.mxu0 0.0
    %424 = vmatpush1.xpose.msra.mxu0 0.0
    %425 = vmatprep.subr.mxu0 0.0
    %426 = vmatpush1.xpose.msra.mxu0 0.0
    %427 = vmatprep.subr.mxu0 0.0
    %428 = vmatpush1.xpose.msra.mxu0 %v91
    %429 = vmatprep.subr.mxu0 0.0
    %430 = vmatpush1.xpose.msra.mxu0 %v88
    %431 = vmatprep.subr.mxu0 0.0
    %432 = vmatpush1.xpose.msra.mxu0 %v85
    %433 = vmatprep.subr.mxu0 0.0
    %434 = vmatpush1.xpose.msra.mxu0 %v82
    %435 = vmatprep.subr.mxu0 0.0
    %436 = vmatpush2.xpose.msra.mxu0 0.0
    %437 = vmatprep.subr.mxu0 0.0
    %438 = vmatpush2.xpose.msra.mxu0 0.0
    %439 = vmatprep.subr.mxu0 0.0
    %440 = vmatpush2.xpose.msra.mxu0 0.0
    %441 = vmatprep.subr.mxu0 0.0
    %442 = vmatpush2.xpose.msra.mxu0 0.0
    %443 = vmatprep.subr.mxu0 0.0
    %444 = vmatpush2.xpose.msra.mxu0 0.0
    %445 = vmatprep.subr.mxu0 0.0
    %446 = vmatpush2.xpose.msra.mxu0 0.0
    %447 = vmatprep.subr.mxu0 0.0
    %448 = vmatpush2.xpose.msra.mxu0 0.0
    %449 = vmatprep.subr.mxu0 0.0
    %450 = vmatpush2.xpose.msra.mxu0 0.0
    %451 = vmatprep.subr.mxu0 0.0
    %452 = vmatpush2.xpose.msra.mxu0 0.0
    %453 = vmatprep.subr.mxu0 0.0
    %454 = vmatpush2.xpose.msra.mxu0 0.0
    %455 = vmatprep.subr.mxu0 0.0
    %456 = vmatpush2.xpose.msra.mxu0 0.0
    %457 = vmatprep.subr.mxu0 0.0
    %458 = vmatpush2.xpose.msra.mxu0 0.0
    %459 = vmatprep.subr.mxu0 0.0
    %460 = vmatpush2.xpose.msra.mxu0 0.0
    %461 = vmatprep.subr.mxu0 0.0
    %462 = vmatpush2.xpose.msra.mxu0 0.0
    %463 = vmatprep.subr.mxu0 0.0
    %464 = vmatpush2.xpose.msra.mxu0 0.0
    %465 = vmatprep.subr.mxu0 0.0
    %466 = vmatpush2.xpose.msra.mxu0 0.0
    %467 = vmatprep.mubr.f32.mxu0 0.0
    %468 = vmatmul.mubr.f32.gmra.mxu0 %v401
    %v469 = vpop.f32.mrf.mxu0
    %v470 = vadd.f32 %v75, %v469
    %v471 = vpop.f32.mrf.mxu0
    %472 = vdwg.mxu0
    %v473 = vtanh.pop %v470
    %474 = vmatprep.subr.mxu0 0.0
    %475 = vmatpush1.xpose.msra.mxu0 0.0
    %476 = vmatprep.subr.mxu0 0.0
    %477 = vmatpush1.xpose.msra.mxu0 0.0
    %478 = vmatprep.subr.mxu0 0.0
    %479 = vmatpush1.xpose.msra.mxu0 0.0
    %480 = vmatprep.subr.mxu0 0.0
    %481 = vmatpush1.xpose.msra.mxu0 0.0
    %482 = vmatprep.subr.mxu0 0.0
    %483 = vmatpush1.xpose.msra.mxu0 0.0
    %484 = vmatprep.subr.mxu0 0.0
    %485 = vmatpush1.xpose.msra.mxu0 0.0
    %486 = vmatprep.subr.mxu0 0.0
    %487 = vmatpush1.xpose.msra.mxu0 0.0
    %488 = vmatprep.subr.mxu0 0.0
    %489 = vmatpush1.xpose.msra.mxu0 0.0
    %490 = vmatprep.subr.mxu0 0.0
    %491 = vmatpush1.xpose.msra.mxu0 0.0
    %492 = vmatprep.subr.mxu0 0.0
    %493 = vmatpush1.xpose.msra.mxu0 0.0
    %494 = vmatprep.subr.mxu0 0.0
    %495 = vmatpush1.xpose.msra.mxu0 0.0
    %496 = vmatprep.subr.mxu0 0.0
    %497 = vmatpush1.xpose.msra.mxu0 0.0
    %498 = vmatprep.subr.mxu0 0.0
    %499 = vmatpush1.xpose.msra.mxu0 %v180
    %500 = vmatprep.subr.mxu0 0.0
    %501 = vmatpush1.xpose.msra.mxu0 %v177
    %502 = vmatprep.subr.mxu0 0.0
    %503 = vmatpush1.xpose.msra.mxu0 %v174
    %504 = vmatprep.subr.mxu0 0.0
    %505 = vmatpush1.xpose.msra.mxu0 %v171
    %506 = vmatprep.subr.mxu0 0.0
    %507 = vmatpush2.xpose.msra.mxu0 0.0
    %508 = vmatprep.subr.mxu0 0.0
    %509 = vmatpush2.xpose.msra.mxu0 0.0
    %510 = vmatprep.subr.mxu0 0.0
    %511 = vmatpush2.xpose.msra.mxu0 0.0
    %512 = vmatprep.subr.mxu0 0.0
    %513 = vmatpush2.xpose.msra.mxu0 0.0
    %514 = vmatprep.subr.mxu0 0.0
    %515 = vmatpush2.xpose.msra.mxu0 0.0
    %516 = vmatprep.subr.mxu0 0.0
    %517 = vmatpush2.xpose.msra.mxu0 0.0
    %518 = vmatprep.subr.mxu0 0.0
    %519 = vmatpush2.xpose.msra.mxu0 0.0
    %520 = vmatprep.subr.mxu0 0.0
    %521 = vmatpush2.xpose.msra.mxu0 0.0
    %522 = vmatprep.subr.mxu0 0.0
    %523 = vmatpush2.xpose.msra.mxu0 0.0
    %524 = vmatprep.subr.mxu0 0.0
    %525 = vmatpush2.xpose.msra.mxu0 0.0
    %526 = vmatprep.subr.mxu0 0.0
    %527 = vmatpush2.xpose.msra.mxu0 0.0
    %528 = vmatprep.subr.mxu0 0.0
    %529 = vmatpush2.xpose.msra.mxu0 0.0
    %530 = vmatprep.subr.mxu0 0.0
    %531 = vmatpush2.xpose.msra.mxu0 0.0
    %532 = vmatprep.subr.mxu0 0.0
    %533 = vmatpush2.xpose.msra.mxu0 0.0
    %534 = vmatprep.subr.mxu0 0.0
    %535 = vmatpush2.xpose.msra.mxu0 0.0
    %536 = vmatprep.subr.mxu0 0.0
    %537 = vmatpush2.xpose.msra.mxu0 0.0
    %538 = vmatprep.mubr.f32.mxu0 0.0
    %539 = vmatmul.mubr.f32.gmra.mxu0 %v401
    %v540 = vpop.f32.mrf.mxu0
    %v541 = vadd.f32 %v168, %v540
    %v542 = vpop.f32.mrf.mxu0
    %543 = vdwg.mxu0
    %v544 = vmax.f32 %v541, 0.0
    %545 = vrot.lane.b32.xlu0 %v70, 32
    %v546 = vpop.permute.xlu0 %545
    %v547 = vsel %vm77, %v546, 0
    %549 = vmatprep.subr.mxu0 0.0
    %550 = vmatpush1.xpose.msra.mxu0 0.0
    %551 = vmatprep.subr.mxu0 0.0
    %552 = vmatpush1.xpose.msra.mxu0 0.0
    %553 = vmatprep.subr.mxu0 0.0
    %554 = vmatpush1.xpose.msra.mxu0 0.0
    %555 = vmatprep.subr.mxu0 0.0
    %556 = vmatpush1.xpose.msra.mxu0 0.0
    %557 = vmatprep.subr.mxu0 0.0
    %558 = vmatpush1.xpose.msra.mxu0 0.0
    %559 = vmatprep.subr.mxu0 0.0
    %560 = vmatpush1.xpose.msra.mxu0 0.0
    %561 = vmatprep.subr.mxu0 0.0
    %562 = vmatpush1.xpose.msra.mxu0 0.0
    %563 = vmatprep.subr.mxu0 0.0
    %564 = vmatpush1.xpose.msra.mxu0 0.0
    %565 = vmatprep.subr.mxu0 0.0
    %566 = vmatpush1.xpose.msra.mxu0 0.0
    %567 = vmatprep.subr.mxu0 0.0
    %568 = vmatpush1.xpose.msra.mxu0 0.0
    %569 = vmatprep.subr.mxu0 0.0
    %570 = vmatpush1.xpose.msra.mxu0 0.0
    %571 = vmatprep.subr.mxu0 0.0
    %572 = vmatpush1.xpose.msra.mxu0 0.0
    %573 = vmatprep.subr.mxu0 0.0
    %574 = vmatpush1.xpose.msra.mxu0 %v91
    %575 = vmatprep.subr.mxu0 0.0
    %576 = vmatpush1.xpose.msra.mxu0 %v88
    %577 = vmatprep.subr.mxu0 0.0
    %578 = vmatpush1.xpose.msra.mxu0 %v85
    %579 = vmatprep.subr.mxu0 0.0
    %580 = vmatpush1.xpose.msra.mxu0 %v82
    %581 = vmatprep.subr.mxu0 0.0
    %582 = vmatpush2.xpose.msra.mxu0 0.0
    %583 = vmatprep.subr.mxu0 0.0
    %584 = vmatpush2.xpose.msra.mxu0 0.0
    %585 = vmatprep.subr.mxu0 0.0
    %586 = vmatpush2.xpose.msra.mxu0 0.0
    %587 = vmatprep.subr.mxu0 0.0
    %588 = vmatpush2.xpose.msra.mxu0 0.0
    %589 = vmatprep.subr.mxu0 0.0
    %590 = vmatpush2.xpose.msra.mxu0 0.0
    %591 = vmatprep.subr.mxu0 0.0
    %592 = vmatpush2.xpose.msra.mxu0 0.0
    %593 = vmatprep.subr.mxu0 0.0
    %594 = vmatpush2.xpose.msra.mxu0 0.0
    %595 = vmatprep.subr.mxu0 0.0
    %596 = vmatpush2.xpose.msra.mxu0 0.0
    %597 = vmatprep.subr.mxu0 0.0
    %598 = vmatpush2.xpose.msra.mxu0 0.0
    %599 = vmatprep.subr.mxu0 0.0
    %600 = vmatpush2.xpose.msra.mxu0 0.0
    %601 = vmatprep.subr.mxu0 0.0
    %602 = vmatpush2.xpose.msra.mxu0 0.0
    %603 = vmatprep.subr.mxu0 0.0
    %604 = vmatpush2.xpose.msra.mxu0 0.0
    %605 = vmatprep.subr.mxu0 0.0
    %606 = vmatpush2.xpose.msra.mxu0 0.0
    %607 = vmatprep.subr.mxu0 0.0
    %608 = vmatpush2.xpose.msra.mxu0 0.0
    %609 = vmatprep.subr.mxu0 0.0
    %610 = vmatpush2.xpose.msra.mxu0 0.0
    %611 = vmatprep.subr.mxu0 0.0
    %612 = vmatpush2.xpose.msra.mxu0 0.0
    %613 = vmatprep.mubr.f32.mxu0 0.0
    %614 = vmatmul.mubr.f32.gmra.mxu0 %v547
    %v615 = vpop.f32.mrf.mxu0
    %v616 = vadd.f32 %v75, %v615
    %v617 = vpop.f32.mrf.mxu0
    %618 = vdwg.mxu0
    %v619 = vtanh.pop %v616
    %620 = vmatprep.subr.mxu0 0.0
    %621 = vmatpush1.xpose.msra.mxu0 0.0
    %622 = vmatprep.subr.mxu0 0.0
    %623 = vmatpush1.xpose.msra.mxu0 0.0
    %624 = vmatprep.subr.mxu0 0.0
    %625 = vmatpush1.xpose.msra.mxu0 0.0
    %626 = vmatprep.subr.mxu0 0.0
    %627 = vmatpush1.xpose.msra.mxu0 0.0
    %628 = vmatprep.subr.mxu0 0.0
    %629 = vmatpush1.xpose.msra.mxu0 0.0
    %630 = vmatprep.subr.mxu0 0.0
    %631 = vmatpush1.xpose.msra.mxu0 0.0
    %632 = vmatprep.subr.mxu0 0.0
    %633 = vmatpush1.xpose.msra.mxu0 0.0
    %634 = vmatprep.subr.mxu0 0.0
    %635 = vmatpush1.xpose.msra.mxu0 0.0
    %636 = vmatprep.subr.mxu0 0.0
    %637 = vmatpush1.xpose.msra.mxu0 0.0
    %638 = vmatprep.subr.mxu0 0.0
    %639 = vmatpush1.xpose.msra.mxu0 0.0
    %640 = vmatprep.subr.mxu0 0.0
    %641 = vmatpush1.xpose.msra.mxu0 0.0
    %642 = vmatprep.subr.mxu0 0.0
    %643 = vmatpush1.xpose.msra.mxu0 0.0
    %644 = vmatprep.subr.mxu0 0.0
    %645 = vmatpush1.xpose.msra.mxu0 %v180
    %646 = vmatprep.subr.mxu0 0.0
    %647 = vmatpush1.xpose.msra.mxu0 %v177
    %648 = vmatprep.subr.mxu0 0.0
    %649 = vmatpush1.xpose.msra.mxu0 %v174
    %650 = vmatprep.subr.mxu0 0.0
    %651 = vmatpush1.xpose.msra.mxu0 %v171
    %652 = vmatprep.subr.mxu0 0.0
    %653 = vmatpush2.xpose.msra.mxu0 0.0
    %654 = vmatprep.subr.mxu0 0.0
    %655 = vmatpush2.xpose.msra.mxu0 0.0
    %656 = vmatprep.subr.mxu0 0.0
    %657 = vmatpush2.xpose.msra.mxu0 0.0
    %658 = vmatprep.subr.mxu0 0.0
    %659 = vmatpush2.xpose.msra.mxu0 0.0
    %660 = vmatprep.subr.mxu0 0.0
    %661 = vmatpush2.xpose.msra.mxu0 0.0
    %662 = vmatprep.subr.mxu0 0.0
    %663 = vmatpush2.xpose.msra.mxu0 0.0
    %664 = vmatprep.subr.mxu0 0.0
    %665 = vmatpush2.xpose.msra.mxu0 0.0
    %666 = vmatprep.subr.mxu0 0.0
    %667 = vmatpush2.xpose.msra.mxu0 0.0
    %668 = vmatprep.subr.mxu0 0.0
    %669 = vmatpush2.xpose.msra.mxu0 0.0
    %670 = vmatprep.subr.mxu0 0.0
    %671 = vmatpush2.xpose.msra.mxu0 0.0
    %672 = vmatprep.subr.mxu0 0.0
    %673 = vmatpush2.xpose.msra.mxu0 0.0
    %674 = vmatprep.subr.mxu0 0.0
    %675 = vmatpush2.xpose.msra.mxu0 0.0
    %676 = vmatprep.subr.mxu0 0.0
    %677 = vmatpush2.xpose.msra.mxu0 0.0
    %678 = vmatprep.subr.mxu0 0.0
    %679 = vmatpush2.xpose.msra.mxu0 0.0
    %680 = vmatprep.subr.mxu0 0.0
    %681 = vmatpush2.xpose.msra.mxu0 0.0
    %682 = vmatprep.subr.mxu0 0.0
    %683 = vmatpush2.xpose.msra.mxu0 0.0
    %684 = vmatprep.mubr.f32.mxu0 0.0
    %685 = vmatmul.mubr.f32.gmra.mxu0 %v547
    %v686 = vpop.f32.mrf.mxu0
    %v687 = vadd.f32 %v168, %v686
    %v688 = vpop.f32.mrf.mxu0
    %689 = vdwg.mxu0
    %v690 = vmax.f32 %v687, 0.0
    %v691 = vmax.f32 %v163, %v327
    %v692 = vmax.f32 %v691, %v473
    %v693 = vmax.f32 %v692, %v619
    %v694 = vsub.f32 %v163, %v693
    %v695 = vmul.f32 %v694, 1.442695
    %v696 = vpow.pop %v695
    %v697 = vmul.f32 %v696, %v252
    %v698 = vsub.f32 %v327, %v693
    %v699 = vmul.f32 %v698, 1.442695
    %v700 = vpow.pop %v699
    %v701 = vadd.f32 %v696, %v700
    %v702 = vmul.f32 %v700, %v398
    %v703 = vadd.f32 %v697, %v702
    %v704 = vsub.f32 %v473, %v693
    %v705 = vmul.f32 %v704, 1.442695
    %v706 = vpow.pop %v705
    %v707 = vadd.f32 %v701, %v706
    %v708 = vmul.f32 %v706, %v544
    %v709 = vadd.f32 %v703, %v708
    %v710 = vsub.f32 %v619, %v693
    %v711 = vmul.f32 %v710, 1.442695
    %v712 = vpow.pop %v711
    %v713 = vadd.f32 %v707, %v712
    %v714 = vmul.f32 %v712, %v690
    %v715 = vadd.f32 %v709, %v714
    %v716 = vrcp.pop %v713
    %v717 = vmul.f32 %v715, %v716
    %vm718 = vcmask 254976
    %719 = vst.msk [vmem:[#allocation8] sm:$0x3] %vm718, %v717
    // Predicated region
    $region34: #{tpu_custom_call.1} parent=1 // pred_check
      _
    $region35: #{tpu_custom_call.1} parent=1 // pred_check_branch
      %721 = sbr.rel (0) target = $region37
    $region36: #{tpu_custom_call.1} parent=1 // pred_region
      %s723 = ssub.s32 32, 32
      %724 = vsyncadd [#allocation4], %s723
      %s726 = sshll.u32 [#allocation8], 4
      %s727 = int_to_ptr.vmem [resolvable:$true] %s726
      %729 = dma.vmem_to_hbm [thread:$0]  %s727, 32, %s5, [#allocation4]
    $region37: #{tpu_custom_call.1} parent=1 // pred_fallthru
      _
    // Predicated region
    $region38: #{tpu_custom_call.1} parent=1 // pred_check
      _
    $region39: #{tpu_custom_call.1} parent=1 // pred_check_branch
      %731 = sbr.rel (0) target = $region41
    $region40: #{tpu_custom_call.1} parent=1 // pred_region
      %732 = dma.done [#allocation4], 32
    $region41: #{tpu_custom_call.1} parent=1 // pred_fallthru
      _
    %733 = vsyncpa [#allocation3], 1
    %734 = vsyncpa [#allocation6], 1
    %735 = vsyncpa [#allocation4], 1

</llo_original>
